<compile_context>
chip_gen: v6e
topology: v6e:2x2x1
jax: 0.10.0
libtpu: 0.0.40
codegen_flags: <defaults>
</compile_context>

<pallas_src>
import math

import jax
import jax.numpy as jnp
from jax.experimental import pallas as pl
from jax.experimental.pallas import tpu as pltpu

LANE = 128
H1_LOGICAL, H2_LOGICAL = 100, 200   # PyTorch module's hidden sizes
H1_PAD, H2_PAD = 128, 256           # lane-aligned padded hidden sizes

# grid=() keeps x + h1 (Bx128 f32) + h2 (Bx256 f32) + out (Bx128 f32) live in VMEM,
# ~2 KiB/row.  1024 rows ~= 2 MiB: comfortably inside the default scoped VMEM on
# v5e (16 MiB), v6e (32 MiB) and v7x (32 MiB scoped / 64 MiB physical).
SINGLE_SHOT_MAX_B = 1024
MAX_BATCH_TILE = 1024               # per-tile VMEM at 1024 rows is still < ~5 MiB


def _round_up(n, m):
    return ((n + m - 1) // m) * m


def mlp_kernel(x_ref, w1_ref, b1_ref, w2_ref, b2_ref, w3_ref, b3_ref, o_ref):
    # Whole (padded, lane-aligned) layer chain for one batch tile; all matmuls on the
    # MXU with f32 accumulation, bias/ReLU in f32 on the VPU.
    cd = w1_ref.dtype                                  # matmul input dtype (bf16)
    x = x_ref[...].astype(cd)

    h1 = jnp.dot(x, w1_ref[...], preferred_element_type=jnp.float32) + b1_ref[...]
    h1 = jnp.maximum(h1, 0.0)                          # ReLU (f32)

    h2 = jnp.dot(h1.astype(cd), w2_ref[...],
                 preferred_element_type=jnp.float32) + b2_ref[...]
    h2 = jnp.maximum(h2, 0.0)                          # ReLU (f32)

    o_ref[...] = (jnp.dot(h2.astype(cd), w3_ref[...],
                          preferred_element_type=jnp.float32)
                  + b3_ref[...]).astype(o_ref.dtype)


def neural_network_forward(x, params, *, batch_tile=None, out_dtype=jnp.float32,
                           return_padded=False):
    """x: (B, input_size); params from init_params.

    Returns (B, output_size) in out_dtype (f32 by default; bf16 halves HBM
    writeback).  return_padded=True returns the lane-padded (B, out_pad) array
    and skips the column-slice copy.
    """
    w1, b1 = params["w1"], params["b1"]
    w2, b2 = params["w2"], params["b2"]
    w3, b3 = params["w3"], params["b3"]
    out_size = params["out_size"]

    B, in_size = x.shape
    in_pad = w1.shape[0]
    out_pad = w3.shape[1]

    # Cast to the compute dtype once (halves x DMA bytes) and lane-pad the feature
    # dim so the layer-1 operands are lane-dense like everything else.
    x = x.astype(w1.dtype)
    if in_size != in_pad:
        x = jnp.pad(x, ((0, 0), (0, in_pad - in_size)))

    def finish(out_padded):
        return out_padded if return_padded else out_padded[:, :out_size]

    # Auto tile selection for large batches: big tiles amortize the ~600-cycle
    # per-grid-step overhead; >=2 tiles so v7x's 2nd TensorCore is used.
    if batch_tile is None and B > SINGLE_SHOT_MAX_B:
        Bp_guess = _round_up(B, LANE)
        batch_tile = min(MAX_BATCH_TILE, _round_up((Bp_guess + 1) // 2, LANE))

    if batch_tile is None or (B <= batch_tile and B <= SINGLE_SHOT_MAX_B):
        # Small/medium batch: single invocation, everything resident in VMEM.
        full = lambda shape: pl.BlockSpec(shape, lambda: (0,) * len(shape))
        out_padded = pl.pallas_call(
            mlp_kernel,
            out_shape=jax.ShapeDtypeStruct((B, out_pad), out_dtype),
            grid=(),
            in_specs=[
                full(x.shape),
                full(w1.shape), full(b1.shape),
                full(w2.shape), full(b2.shape),
                full(w3.shape), full(b3.shape),
            ],
            out_specs=full((B, out_pad)),
        )(x, w1, b1, w2, b2, w3, b3)
        return finish(out_padded)

    # Large batch: 1-D parallel grid over batch tiles; weights stay VMEM-resident
    # (grid-invariant BlockSpecs), x/out DMAs pipelined behind the matmuls.
    bt = min(_round_up(batch_tile, LANE), _round_up(B, LANE))
    Bp = _round_up(B, bt)
    if Bp != B:
        x = jnp.pad(x, ((0, Bp - B), (0, 0)))
    n_tiles = Bp // bt

    rep = lambda shape: pl.BlockSpec(shape, lambda i: (0,) * len(shape))
    out_padded = pl.pallas_call(
        mlp_kernel,
        out_shape=jax.ShapeDtypeStruct((Bp, out_pad), out_dtype),
        grid=(n_tiles,),
        in_specs=[
            pl.BlockSpec((bt, in_pad), lambda i: (i, 0)),
            rep(w1.shape), rep(b1.shape),
            rep(w2.shape), rep(b2.shape),
            rep(w3.shape), rep(b3.shape),
        ],
        out_specs=pl.BlockSpec((bt, out_pad), lambda i: (i, 0)),
        compiler_params=pltpu.CompilerParams(dimension_semantics=("parallel",)),
    )(x, w1, b1, w2, b2, w3, b3)
    if Bp != B:
        out_padded = out_padded[:B]
    return finish(out_padded)


def init_params(key, input_size, output_size, param_dtype=jnp.bfloat16):
    """PyTorch-Linear-style U(-1/sqrt(fan_in), 1/sqrt(fan_in)) init, then zero-pad
    all feature dims to lane-aligned sizes (input->round_up(in,128), 100->128,
    200->256, out->round_up(out,128)).  Zero padding is semantically neutral
    (ReLU(0)=0; zero weight rows/cols contribute nothing).
    Pass param_dtype=jnp.float32 if bf16 activation quantization is unacceptable."""
    in_pad = _round_up(input_size, LANE)
    out_pad = _round_up(output_size, LANE)
    logical = [(input_size, H1_LOGICAL), (H1_LOGICAL, H2_LOGICAL), (H2_LOGICAL, output_size)]
    padded = [(in_pad, H1_PAD), (H1_PAD, H2_PAD), (H2_PAD, out_pad)]

    params = {"out_size": output_size, "in_size": input_size}
    keys = jax.random.split(key, 2 * len(logical))
    for i, ((fi, fo), (pi, po)) in enumerate(zip(logical, padded)):
        bound = 1.0 / math.sqrt(fi)
        w = jax.random.uniform(keys[2 * i], (fi, fo), jnp.float32, -bound, bound)
        b = jax.random.uniform(keys[2 * i + 1], (1, fo), jnp.float32, -bound, bound)
        w = jnp.pad(w, ((0, pi - fi), (0, po - fo)))
        b = jnp.pad(b, ((0, 0), (0, po - fo)))
        params[f"w{i + 1}"] = w.astype(param_dtype)   # compute dtype into the MXU
        params[f"b{i + 1}"] = b                       # biases stay f32 (VPU path)
    return params


def reference_forward(x, params):
    """Pure-JAX reference with the same dtype/padding scheme as the kernel."""
    cd = params["w1"].dtype
    in_pad = params["w1"].shape[0]
    x = x.astype(cd)
    if x.shape[1] != in_pad:
        x = jnp.pad(x, ((0, 0), (0, in_pad - x.shape[1])))
    h1 = jnp.maximum(jnp.dot(x, params["w1"],
                             preferred_element_type=jnp.float32) + params["b1"], 0.0)
    h2 = jnp.maximum(jnp.dot(h1.astype(cd), params["w2"],
                             preferred_element_type=jnp.float32) + params["b2"], 0.0)
    out = jnp.dot(h2.astype(cd), params["w3"],
                  preferred_element_type=jnp.float32) + params["b3"]
    return out[:, :params["out_size"]]


# TODO(synk): train()/evaluate() (optimizer step, cross-entropy loss, accuracy) are
# host-side training logic with no Pallas equivalent; only the forward pass is here.

if __name__ == "__main__":
    key = jax.random.PRNGKey(0)
    k_x, k_p = jax.random.split(key)

    batch, input_size, output_size = 8, 32, 10
    x = jax.random.normal(k_x, (batch, input_size), jnp.float32)
    params = init_params(k_p, input_size, output_size)

    # 1) Small-batch path (grid=()) — matches the matched-precision reference tightly.
    out = jax.block_until_ready(neural_network_forward(x, params))
    ref = reference_forward(x, params)
    assert out.shape == (batch, output_size), out.shape
    assert jnp.allclose(out, ref, atol=1e-3, rtol=1e-3), "mismatch vs reference"

    # 2) Loose check against full-f32 math (only bf16 quantization differs).
    f32_params = {k: (v.astype(jnp.float32) if hasattr(v, "dtype") else v)
                  for k, v in params.items()}
    ref_f32 = reference_forward(x, f32_params)
    assert jnp.allclose(out, ref_f32, atol=5e-2, rtol=5e-2), "bf16 drift too large"

    # 3) Auto-tiled parallel-grid path (B > SINGLE_SHOT_MAX_B -> two 1024-row tiles).
    big_B = 2048
    xb = jax.random.normal(jax.random.PRNGKey(1), (big_B, input_size), jnp.float32)
    out_b = jax.block_until_ready(neural_network_forward(xb, params))
    ref_b = reference_forward(xb, params)
    assert out_b.shape == (big_B, output_size), out_b.shape
    assert jnp.allclose(out_b, ref_b, atol=1e-3, rtol=1e-3), "mismatch (auto-tiled path)"

    # 4) Explicit tile with a ragged batch (exercises row padding + slicing).
    rag_B = 200
    xr = jax.random.normal(jax.random.PRNGKey(2), (rag_B, input_size), jnp.float32)
    out_r = jax.block_until_ready(neural_network_forward(xr, params, batch_tile=128))
    ref_r = reference_forward(xr, params)
    assert out_r.shape == (rag_B, output_size), out_r.shape
    assert jnp.allclose(out_r, ref_r, atol=1e-3, rtol=1e-3), "mismatch (ragged tiled path)"

    # 5) bf16 writeback option (halves output HBM traffic; loose tolerance).
    out_bf16 = jax.block_until_ready(
        neural_network_forward(xb, params, out_dtype=jnp.bfloat16))
    assert out_bf16.dtype == jnp.bfloat16
    assert jnp.allclose(out_bf16.astype(jnp.float32), ref_b, atol=5e-2, rtol=5e-2), \
        "bf16 output drift too large"

    print("KERNEL_OK")
</pallas_src>

<mosaic_0001>
module attributes {stable_mosaic.version = 11 : i64} {
  func.func @mlp_kernel(%arg0: memref<8x128xbf16, #tpu.memory_space<vmem>>, %arg1: memref<128x128xbf16, #tpu.memory_space<vmem>>, %arg2: memref<1x128xf32, #tpu.memory_space<vmem>>, %arg3: memref<128x256xbf16, #tpu.memory_space<vmem>>, %arg4: memref<1x256xf32, #tpu.memory_space<vmem>>, %arg5: memref<256x128xbf16, #tpu.memory_space<vmem>>, %arg6: memref<1x128xf32, #tpu.memory_space<vmem>>, %arg7: memref<8x128xf32, #tpu.memory_space<vmem>>) attributes {dimension_semantics = [], scalar_prefetch = 0 : i64, scratch_operands = 0 : i64, tpu.core_type = #tpu.core_type<tc>} {
    %c0 = arith.constant 0 : index
    %c0_0 = arith.constant 0 : index
    %0 = vector.load %arg0[%c0, %c0_0] : memref<8x128xbf16, #tpu.memory_space<vmem>>, vector<8x128xbf16>
    %c0_1 = arith.constant 0 : index
    %c0_2 = arith.constant 0 : index
    %1 = vector.load %arg1[%c0_1, %c0_2] : memref<128x128xbf16, #tpu.memory_space<vmem>>, vector<128x128xbf16>
    %cst = arith.constant dense<0.000000e+00> : vector<8x128xf32>
    %2 = tpu.matmul %0, %1, %cst {dimension_numbers = #tpu.dot_dimension_numbers<[1], [0], [0], [1], [0, 0, 1, 1], [], []>} : vector<8x128xbf16>, vector<128x128xbf16>, vector<8x128xf32> -> vector<8x128xf32>
    %c0_3 = arith.constant 0 : index
    %c0_4 = arith.constant 0 : index
    %3 = vector.load %arg2[%c0_3, %c0_4] : memref<1x128xf32, #tpu.memory_space<vmem>>, vector<1x128xf32>
    %4 = vector.broadcast %3 : vector<1x128xf32> to vector<8x128xf32>
    %5 = arith.addf %2, %4 : vector<8x128xf32>
    %cst_5 = arith.constant 0.000000e+00 : f32
    %6 = vector.broadcast %cst_5 : f32 to vector<8x128xf32>
    %7 = arith.maximumf %5, %6 : vector<8x128xf32>
    %8 = arith.truncf %7 : vector<8x128xf32> to vector<8x128xbf16>
    %c0_6 = arith.constant 0 : index
    %c0_7 = arith.constant 0 : index
    %9 = vector.load %arg3[%c0_6, %c0_7] : memref<128x256xbf16, #tpu.memory_space<vmem>>, vector<128x256xbf16>
    %cst_8 = arith.constant dense<0.000000e+00> : vector<8x256xf32>
    %10 = tpu.matmul %8, %9, %cst_8 {dimension_numbers = #tpu.dot_dimension_numbers<[1], [0], [0], [1], [0, 0, 1, 1], [], []>} : vector<8x128xbf16>, vector<128x256xbf16>, vector<8x256xf32> -> vector<8x256xf32>
    %c0_9 = arith.constant 0 : index
    %c0_10 = arith.constant 0 : index
    %11 = vector.load %arg4[%c0_9, %c0_10] : memref<1x256xf32, #tpu.memory_space<vmem>>, vector<1x256xf32>
    %12 = vector.broadcast %11 : vector<1x256xf32> to vector<8x256xf32>
    %13 = arith.addf %10, %12 : vector<8x256xf32>
    %cst_11 = arith.constant 0.000000e+00 : f32
    %14 = vector.broadcast %cst_11 : f32 to vector<8x256xf32>
    %15 = arith.maximumf %13, %14 : vector<8x256xf32>
    %16 = arith.truncf %15 : vector<8x256xf32> to vector<8x256xbf16>
    %c0_12 = arith.constant 0 : index
    %c0_13 = arith.constant 0 : index
    %17 = vector.load %arg5[%c0_12, %c0_13] : memref<256x128xbf16, #tpu.memory_space<vmem>>, vector<256x128xbf16>
    %cst_14 = arith.constant dense<0.000000e+00> : vector<8x128xf32>
    %18 = tpu.matmul %16, %17, %cst_14 {dimension_numbers = #tpu.dot_dimension_numbers<[1], [0], [0], [1], [0, 0, 1, 1], [], []>} : vector<8x256xbf16>, vector<256x128xbf16>, vector<8x128xf32> -> vector<8x128xf32>
    %c0_15 = arith.constant 0 : index
    %c0_16 = arith.constant 0 : index
    %19 = vector.load %arg6[%c0_15, %c0_16] : memref<1x128xf32, #tpu.memory_space<vmem>>, vector<1x128xf32>
    %20 = vector.broadcast %19 : vector<1x128xf32> to vector<8x128xf32>
    %21 = arith.addf %18, %20 : vector<8x128xf32>
    %c0_17 = arith.constant 0 : index
    %c0_18 = arith.constant 0 : index
    %22 = vector.load %arg7[%c0_17, %c0_18] : memref<8x128xf32, #tpu.memory_space<vmem>>, vector<8x128xf32>
    tpu.vector_store %arg7[%c0_17, %c0_18], %21 {strides = array<i32>} : memref<8x128xf32, #tpu.memory_space<vmem>>, vector<8x128xf32>,
    return
  }
}

</mosaic_0001>

<llo_original>
// kernel: tpu_custom_call.1
$region0: #{tpu_custom_call.1}
  #allocation0 [shape = 'u32[]', space=smem, size = 0x4, offset = 0x4, fixed_abs, tag = 'smem constant byte address 0x4 - core index']
  #allocation1 [shape = 'u32[144,128]{1,0:T(1,128)}', space=vmem, size = 0x12000, scoped, tag = 'internal scratch']
  %s0 = inlined_call_operand.hbm [shape: bf16[8,128], index: 0, kind: input, shape index: {}]
  %s1 = inlined_call_operand.hbm [shape: bf16[128,128], index: 1, kind: input, shape index: {}]
  %s2 = inlined_call_operand.vmem [shape: f32[1,128], index: 2, kind: input, shape index: {}]
  %s3 = inlined_call_operand.hbm [shape: bf16[128,256], index: 3, kind: input, shape index: {}]
  %s4 = inlined_call_operand.vmem [shape: f32[1,256], index: 4, kind: input, shape index: {}]
  %s5 = inlined_call_operand.hbm [shape: bf16[256,128], index: 5, kind: input, shape index: {}]
  %s6 = inlined_call_operand.vmem [shape: f32[1,128], index: 6, kind: input, shape index: {}]
  %s7 = inlined_call_operand.hbm [shape: f32[8,128], index: 7, kind: output, shape index: {}]
  %s8 = sld [smem:[#allocation0]]
  $region54: #{tpu_custom_call.1} parent=0
    _
  %s10 = ssub.s32 1, %s8
  %s11 = scalar_select 0, %s10, %s8
  $region1: #{tpu_custom_call.1} parent=0
    #allocation2 [shape = 'u8[2048]{0}', space=vmem, size = 0x800, scoped, tag = 'input window, operand 0, single buffered']
    #allocation3 [shape = 's32[1]{0}', space=sflag, size = 0x4, scoped, tag = 'scoped memory for tpu_custom_call.1']
    #allocation4 [shape = 's32[1]{0}', space=sflag, size = 0x4, scoped, tag = 'scoped memory for tpu_custom_call.1']
    #allocation5 [shape = 'u8[32768]{0}', space=vmem, size = 0x8000, scoped, tag = 'input window, operand 1, single buffered']
    #allocation6 [shape = 's32[1]{0}', space=sflag, size = 0x4, scoped, tag = 'scoped memory for tpu_custom_call.1']
    #allocation7 [shape = 'u8[65536]{0}', space=vmem, size = 0x10000, scoped, tag = 'input window, operand 3, single buffered']
    #allocation8 [shape = 'u8[65536]{0}', space=vmem, size = 0x10000, scoped, tag = 'input window, operand 5, single buffered']
    #allocation9 [shape = 's32[1]{0}', space=sflag, size = 0x4, scoped, tag = 'scoped memory for tpu_custom_call.1']
    #allocation10 [shape = 'u8[4096]{0}', space=vmem, size = 0x1000, scoped, tag = 'output window, operand 0, single buffered']
    %12 = vsyncpa [#allocation3], 0
    %13 = vsyncpa [#allocation6], 0
    %14 = vsyncpa [#allocation9], 0
    %15 = vsyncpa [#allocation4], 0
    // Predicated region
    $region2: #{tpu_custom_call.1} parent=1 // pred_check
      _
    $region3: #{tpu_custom_call.1} parent=1 // pred_check_branch
      %17 = sbr.rel (0) target = $region5
    $region4: #{tpu_custom_call.1} parent=1 // pred_region
      %s19 = ssub.s32 64, 64
      %20 = vsyncadd [#allocation3], %s19
      %s22 = sshll.u32 [#allocation2], 4
      %s23 = int_to_ptr.vmem [resolvable:$true] %s22
      %25 = dma.hbm_to_vmem [thread:$0]  %s0, 64, %s23, [#allocation3]
    $region5: #{tpu_custom_call.1} parent=1 // pred_fallthru
      _
    // Predicated region
    $region6: #{tpu_custom_call.1} parent=1 // pred_check
      _
    $region7: #{tpu_custom_call.1} parent=1 // pred_check_branch
      %27 = sbr.rel (0) target = $region9
    $region8: #{tpu_custom_call.1} parent=1 // pred_region
      %s29 = ssub.s32 1024, 1024
      %30 = vsyncadd [#allocation6], %s29
      %s31 = sshll.u32 [#allocation5], 4
      %s32 = int_to_ptr.vmem [resolvable:$true] %s31
      %37 = dma.hbm_to_vmem [thread:$0]  %s1, 1024, %s32, [#allocation6], 64, 64, 4
    $region9: #{tpu_custom_call.1} parent=1 // pred_fallthru
      _
    // Predicated region
    $region10: #{tpu_custom_call.1} parent=1 // pred_check
      _
    $region11: #{tpu_custom_call.1} parent=1 // pred_check_branch
      %39 = sbr.rel (0) target = $region13
    $region12: #{tpu_custom_call.1} parent=1 // pred_region
      _
    $region13: #{tpu_custom_call.1} parent=1 // pred_fallthru
      _
    // Predicated region
    $region14: #{tpu_custom_call.1} parent=1 // pred_check
      _
    $region15: #{tpu_custom_call.1} parent=1 // pred_check_branch
      %41 = sbr.rel (0) target = $region17
    $region16: #{tpu_custom_call.1} parent=1 // pred_region
      %s43 = ssub.s32 2048, 2048
      %44 = vsyncadd [#allocation6], %s43
      %s45 = sshll.u32 [#allocation7], 4
      %s46 = int_to_ptr.vmem [resolvable:$true] %s45
      %51 = dma.hbm_to_vmem [thread:$0]  %s3, 2048, %s46, [#allocation6], 128, 128, 8
    $region17: #{tpu_custom_call.1} parent=1 // pred_fallthru
      _
    // Predicated region
    $region18: #{tpu_custom_call.1} parent=1 // pred_check
      _
    $region19: #{tpu_custom_call.1} parent=1 // pred_check_branch
      %53 = sbr.rel (0) target = $region21
    $region20: #{tpu_custom_call.1} parent=1 // pred_region
      _
    $region21: #{tpu_custom_call.1} parent=1 // pred_fallthru
      _
    // Predicated region
    $region22: #{tpu_custom_call.1} parent=1 // pred_check
      _
    $region23: #{tpu_custom_call.1} parent=1 // pred_check_branch
      %55 = sbr.rel (0) target = $region25
    $region24: #{tpu_custom_call.1} parent=1 // pred_region
      %s57 = ssub.s32 2048, 2048
      %58 = vsyncadd [#allocation9], %s57
      %s59 = sshll.u32 [#allocation8], 4
      %s60 = int_to_ptr.vmem [resolvable:$true] %s59
      %65 = dma.hbm_to_vmem [thread:$0]  %s5, 2048, %s60, [#allocation9], 64, 64, 4
    $region25: #{tpu_custom_call.1} parent=1 // pred_fallthru
      _
    // Predicated region
    $region26: #{tpu_custom_call.1} parent=1 // pred_check
      _
    $region27: #{tpu_custom_call.1} parent=1 // pred_check_branch
      %67 = sbr.rel (0) target = $region29
    $region28: #{tpu_custom_call.1} parent=1 // pred_region
      _
    $region29: #{tpu_custom_call.1} parent=1 // pred_fallthru
      _
    // Predicated region
    $region30: #{tpu_custom_call.1} parent=1 // pred_check
      _
    $region31: #{tpu_custom_call.1} parent=1 // pred_check_branch
      %69 = sbr.rel (0) target = $region33
    $region32: #{tpu_custom_call.1} parent=1 // pred_region
      %70 = dma.done [#allocation3], 64
    $region33: #{tpu_custom_call.1} parent=1 // pred_fallthru
      _
    // Predicated region
    $region34: #{tpu_custom_call.1} parent=1 // pred_check
      _
    $region35: #{tpu_custom_call.1} parent=1 // pred_check_branch
      %72 = sbr.rel (0) target = $region37
    $region36: #{tpu_custom_call.1} parent=1 // pred_region
      %73 = dma.done [#allocation6], 1024
    $region37: #{tpu_custom_call.1} parent=1 // pred_fallthru
      _
    // Predicated region
    $region38: #{tpu_custom_call.1} parent=1 // pred_check
      _
    $region39: #{tpu_custom_call.1} parent=1 // pred_check_branch
      %75 = sbr.rel (0) target = $region41
    $region40: #{tpu_custom_call.1} parent=1 // pred_region
      %76 = dma.done [#allocation6], 2048
    $region41: #{tpu_custom_call.1} parent=1 // pred_fallthru
      _
    // Predicated region
    $region42: #{tpu_custom_call.1} parent=1 // pred_check
      _
    $region43: #{tpu_custom_call.1} parent=1 // pred_check_branch
      %78 = sbr.rel (0) target = $region45
    $region44: #{tpu_custom_call.1} parent=1 // pred_region
      %79 = dma.done [#allocation9], 2048
    $region45: #{tpu_custom_call.1} parent=1 // pred_fallthru
      _
    %v81 = vld [vmem:[#allocation2] sm:$0xf]
    %v82 = vld [vmem:[#allocation5] sm:$0xf]
    %v83 = vld [vmem:[#allocation5 + $0x4] sm:$0xf]
    %v84 = vld [vmem:[#allocation5 + $0x8] sm:$0xf]
    %v85 = vld [vmem:[#allocation5 + $0xc] sm:$0xf]
    %v86 = vld [vmem:[#allocation5 + $0x10] sm:$0xf]
    %v87 = vld [vmem:[#allocation5 + $0x14] sm:$0xf]
    %v88 = vld [vmem:[#allocation5 + $0x18] sm:$0xf]
    %v89 = vld [vmem:[#allocation5 + $0x1c] sm:$0xf]
    %v90 = vld [vmem:[#allocation5 + $0x20] sm:$0xf]
    %v91 = vld [vmem:[#allocation5 + $0x24] sm:$0xf]
    %v92 = vld [vmem:[#allocation5 + $0x28] sm:$0xf]
    %v93 = vld [vmem:[#allocation5 + $0x2c] sm:$0xf]
    %v94 = vld [vmem:[#allocation5 + $0x30] sm:$0xf]
    %v95 = vld [vmem:[#allocation5 + $0x34] sm:$0xf]
    %v96 = vld [vmem:[#allocation5 + $0x38] sm:$0xf]
    %v97 = vld [vmem:[#allocation5 + $0x3c] sm:$0xf]
    %v98 = vld [vmem:[%s2] sm:$0x1]
    %v100 = vlaneseq
    %v101 = vshrl.u32 %v100, 7
    %v102 = vsub.s32 0, %v101
    %v103 = vrot.slane %v98, %v102
    %v121 = vunpack.c.l.b16 %v82
    %v122 = vunpack.c.l.b16 %v83
    %v123 = vunpack.c.l.b16 %v84
    %v124 = vunpack.c.l.b16 %v85
    %v125 = vunpack.c.l.b16 %v86
    %v126 = vunpack.c.l.b16 %v87
    %v127 = vunpack.c.l.b16 %v88
    %v128 = vunpack.c.l.b16 %v89
    %v129 = vunpack.c.l.b16 %v90
    %v130 = vunpack.c.l.b16 %v91
    %v131 = vunpack.c.l.b16 %v92
    %v132 = vunpack.c.l.b16 %v93
    %v133 = vunpack.c.l.b16 %v94
    %v134 = vunpack.c.l.b16 %v95
    %v135 = vunpack.c.l.b16 %v96
    %v136 = vunpack.c.l.b16 %v97
    %v137 = vpack.c.b16 %v122, %v121
    %v138 = vpack.c.b16 %v124, %v123
    %v139 = vpack.c.b16 %v126, %v125
    %v140 = vpack.c.b16 %v128, %v127
    %v141 = vpack.c.b16 %v130, %v129
    %v142 = vpack.c.b16 %v132, %v131
    %v143 = vpack.c.b16 %v134, %v133
    %v144 = vpack.c.b16 %v136, %v135
    %153 = vmatprep.subr.bf16.mxu0 0
    %154 = vmatpush1.bf16.msra.mxu0 %v144
    %155 = vmatprep.subr.bf16.mxu0 0
    %156 = vmatpush1.bf16.msra.mxu0 %v143
    %157 = vmatprep.subr.bf16.mxu0 0
    %158 = vmatpush1.bf16.msra.mxu0 %v142
    %159 = vmatprep.subr.bf16.mxu0 0
    %160 = vmatpush1.bf16.msra.mxu0 %v141
    %161 = vmatprep.subr.bf16.mxu0 0
    %162 = vmatpush1.bf16.msra.mxu0 %v140
    %163 = vmatprep.subr.bf16.mxu0 0
    %164 = vmatpush1.bf16.msra.mxu0 %v139
    %165 = vmatprep.subr.bf16.mxu0 0
    %166 = vmatpush1.bf16.msra.mxu0 %v138
    %167 = vmatprep.subr.bf16.mxu0 0
    %168 = vmatpush1.bf16.msra.mxu0 %v137
    %169 = vmatprep.subr.bf16.mxu0 0
    %170 = vmatpush2.bf16.msra.mxu0 0
    %171 = vmatprep.subr.bf16.mxu0 0
    %172 = vmatpush2.bf16.msra.mxu0 0
    %173 = vmatprep.subr.bf16.mxu0 0
    %174 = vmatpush2.bf16.msra.mxu0 0
    %175 = vmatprep.subr.bf16.mxu0 0
    %176 = vmatpush2.bf16.msra.mxu0 0
    %177 = vmatprep.subr.bf16.mxu0 0
    %178 = vmatpush2.bf16.msra.mxu0 0
    %179 = vmatprep.subr.bf16.mxu0 0
    %180 = vmatpush2.bf16.msra.mxu0 0
    %181 = vmatprep.subr.bf16.mxu0 0
    %182 = vmatpush2.bf16.msra.mxu0 0
    %183 = vmatprep.subr.bf16.mxu0 0
    %184 = vmatpush2.bf16.msra.mxu0 0
    %185 = vmatprep.mubr.bf16.mxu0 0
    %186 = vmatmul.mubr.bf16.gmra.mxu0 %v81
    %v187 = vpop.f32.mrf.mxu0
    %v188 = vadd.f32 %v103, %v187
    %v189 = vpop.f32.mrf.mxu0
    %v190 = vpop.f32.mrf.mxu0
    %v191 = vpop.f32.mrf.mxu0
    %192 = vdwg.mxu0
    %v193 = vmax.f32 %v188, 0.0
    %v194 = vpack.c.bf16 %v193, %v193
    %v195 = vld [vmem:[#allocation7] sm:$0xff]
    %v196 = vld [vmem:[#allocation7 + $0x8] sm:$0xff]
    %v197 = vld [vmem:[#allocation7 + $0x10] sm:$0xff]
    %v198 = vld [vmem:[#allocation7 + $0x18] sm:$0xff]
    %v199 = vld [vmem:[#allocation7 + $0x20] sm:$0xff]
    %v200 = vld [vmem:[#allocation7 + $0x28] sm:$0xff]
    %v201 = vld [vmem:[#allocation7 + $0x30] sm:$0xff]
    %v202 = vld [vmem:[#allocation7 + $0x38] sm:$0xff]
    %v203 = vld [vmem:[#allocation7 + $0x40] sm:$0xff]
    %v204 = vld [vmem:[#allocation7 + $0x48] sm:$0xff]
    %v205 = vld [vmem:[#allocation7 + $0x50] sm:$0xff]
    %v206 = vld [vmem:[#allocation7 + $0x58] sm:$0xff]
    %v207 = vld [vmem:[#allocation7 + $0x60] sm:$0xff]
    %v208 = vld [vmem:[#allocation7 + $0x68] sm:$0xff]
    %v209 = vld [vmem:[#allocation7 + $0x70] sm:$0xff]
    %v210 = vld [vmem:[#allocation7 + $0x78] sm:$0xff]
    %v211 = vld [vmem:[%s4] sm:$0x3]
    %v213 = vlaneseq
    %v214 = vshrl.u32 %v213, 7
    %v215 = vsub.s32 0, %v214
    %v216 = vrot.slane %v211, %v215
    %v217 = vlaneseq
    %v218 = vshrl.u32 %v217, 7
    %v219 = vsub.s32 1, %v218
    %v220 = vrot.slane %v211, %v219
    %v239 = vunpack.c.l.b16 %v195
    %v240 = vunpack.c.h.b16 %v195
    %v241 = vunpack.c.l.b16 %v196
    %v242 = vunpack.c.h.b16 %v196
    %v243 = vunpack.c.l.b16 %v197
    %v244 = vunpack.c.h.b16 %v197
    %v245 = vunpack.c.l.b16 %v198
    %v246 = vunpack.c.h.b16 %v198
    %v247 = vunpack.c.l.b16 %v199
    %v248 = vunpack.c.h.b16 %v199
    %v249 = vunpack.c.l.b16 %v200
    %v250 = vunpack.c.h.b16 %v200
    %v251 = vunpack.c.l.b16 %v201
    %v252 = vunpack.c.h.b16 %v201
    %v253 = vunpack.c.l.b16 %v202
    %v254 = vunpack.c.h.b16 %v202
    %v255 = vunpack.c.l.b16 %v203
    %v256 = vunpack.c.h.b16 %v203
    %v257 = vunpack.c.l.b16 %v204
    %v258 = vunpack.c.h.b16 %v204
    %v259 = vunpack.c.l.b16 %v205
    %v260 = vunpack.c.h.b16 %v205
    %v261 = vunpack.c.l.b16 %v206
    %v262 = vunpack.c.h.b16 %v206
    %v263 = vunpack.c.l.b16 %v207
    %v264 = vunpack.c.h.b16 %v207
    %v265 = vunpack.c.l.b16 %v208
    %v266 = vunpack.c.h.b16 %v208
    %v267 = vunpack.c.l.b16 %v209
    %v268 = vunpack.c.h.b16 %v209
    %v269 = vunpack.c.l.b16 %v210
    %v270 = vunpack.c.h.b16 %v210
    %v271 = vpack.c.b16 %v241, %v239
    %v272 = vpack.c.b16 %v242, %v240
    %v273 = vpack.c.b16 %v245, %v243
    %v274 = vpack.c.b16 %v246, %v244
    %v275 = vpack.c.b16 %v249, %v247
    %v276 = vpack.c.b16 %v250, %v248
    %v277 = vpack.c.b16 %v253, %v251
    %v278 = vpack.c.b16 %v254, %v252
    %v279 = vpack.c.b16 %v257, %v255
    %v280 = vpack.c.b16 %v258, %v256
    %v281 = vpack.c.b16 %v261, %v259
    %v282 = vpack.c.b16 %v262, %v260
    %v283 = vpack.c.b16 %v265, %v263
    %v284 = vpack.c.b16 %v266, %v264
    %v285 = vpack.c.b16 %v269, %v267
    %v286 = vpack.c.b16 %v270, %v268
    %303 = vmatprep.subr.bf16.mxu0 %v286
    %304 = vmatpush1.bf16.msra.mxu0 %v285
    %305 = vmatprep.subr.bf16.mxu0 %v284
    %306 = vmatpush1.bf16.msra.mxu0 %v283
    %307 = vmatprep.subr.bf16.mxu0 %v282
    %308 = vmatpush1.bf16.msra.mxu0 %v281
    %309 = vmatprep.subr.bf16.mxu0 %v280
    %310 = vmatpush1.bf16.msra.mxu0 %v279
    %311 = vmatprep.subr.bf16.mxu0 %v278
    %312 = vmatpush1.bf16.msra.mxu0 %v277
    %313 = vmatprep.subr.bf16.mxu0 %v276
    %314 = vmatpush1.bf16.msra.mxu0 %v275
    %315 = vmatprep.subr.bf16.mxu0 %v274
    %316 = vmatpush1.bf16.msra.mxu0 %v273
    %317 = vmatprep.subr.bf16.mxu0 %v272
    %318 = vmatpush1.bf16.msra.mxu0 %v271
    %319 = vmatprep.subr.bf16.mxu0 0
    %320 = vmatpush2.bf16.msra.mxu0 0
    %321 = vmatprep.subr.bf16.mxu0 0
    %322 = vmatpush2.bf16.msra.mxu0 0
    %323 = vmatprep.subr.bf16.mxu0 0
    %324 = vmatpush2.bf16.msra.mxu0 0
    %325 = vmatprep.subr.bf16.mxu0 0
    %326 = vmatpush2.bf16.msra.mxu0 0
    %327 = vmatprep.subr.bf16.mxu0 0
    %328 = vmatpush2.bf16.msra.mxu0 0
    %329 = vmatprep.subr.bf16.mxu0 0
    %330 = vmatpush2.bf16.msra.mxu0 0
    %331 = vmatprep.subr.bf16.mxu0 0
    %332 = vmatpush2.bf16.msra.mxu0 0
    %333 = vmatprep.subr.bf16.mxu0 0
    %334 = vmatpush2.bf16.msra.mxu0 0
    %335 = vmatprep.mubr.bf16.mxu0 0
    %336 = vmatmul.mubr.bf16.gmra.mxu0 %v194
    %v337 = vpop.f32.mrf.mxu0
    %v338 = vadd.f32 %v216, %v337
    %v339 = vpop.f32.mrf.mxu0
    %v340 = vadd.f32 %v220, %v339
    %v341 = vpop.f32.mrf.mxu0
    %v342 = vpop.f32.mrf.mxu0
    %343 = vdwg.mxu0
    %v344 = vmax.f32 %v338, 0.0
    %v345 = vmax.f32 %v340, 0.0
    %v346 = vpack.c.bf16 %v344, %v344
    %v347 = vpack.c.bf16 %v345, %v345
    %v348 = vld [vmem:[#allocation8] sm:$0xf]
    %v349 = vld [vmem:[#allocation8 + $0x4] sm:$0xf]
    %v350 = vld [vmem:[#allocation8 + $0x8] sm:$0xf]
    %v351 = vld [vmem:[#allocation8 + $0xc] sm:$0xf]
    %v352 = vld [vmem:[#allocation8 + $0x10] sm:$0xf]
    %v353 = vld [vmem:[#allocation8 + $0x14] sm:$0xf]
    %v354 = vld [vmem:[#allocation8 + $0x18] sm:$0xf]
    %v355 = vld [vmem:[#allocation8 + $0x1c] sm:$0xf]
    %v356 = vld [vmem:[#allocation8 + $0x20] sm:$0xf]
    %v357 = vld [vmem:[#allocation8 + $0x24] sm:$0xf]
    %v358 = vld [vmem:[#allocation8 + $0x28] sm:$0xf]
    %v359 = vld [vmem:[#allocation8 + $0x2c] sm:$0xf]
    %v360 = vld [vmem:[#allocation8 + $0x30] sm:$0xf]
    %v361 = vld [vmem:[#allocation8 + $0x34] sm:$0xf]
    %v362 = vld [vmem:[#allocation8 + $0x38] sm:$0xf]
    %v363 = vld [vmem:[#allocation8 + $0x3c] sm:$0xf]
    %v364 = vld [vmem:[#allocation8 + $0x40] sm:$0xf]
    %v365 = vld [vmem:[#allocation8 + $0x44] sm:$0xf]
    %v366 = vld [vmem:[#allocation8 + $0x48] sm:$0xf]
    %v367 = vld [vmem:[#allocation8 + $0x4c] sm:$0xf]
    %v368 = vld [vmem:[#allocation8 + $0x50] sm:$0xf]
    %v369 = vld [vmem:[#allocation8 + $0x54] sm:$0xf]
    %v370 = vld [vmem:[#allocation8 + $0x58] sm:$0xf]
    %v371 = vld [vmem:[#allocation8 + $0x5c] sm:$0xf]
    %v372 = vld [vmem:[#allocation8 + $0x60] sm:$0xf]
    %v373 = vld [vmem:[#allocation8 + $0x64] sm:$0xf]
    %v374 = vld [vmem:[#allocation8 + $0x68] sm:$0xf]
    %v375 = vld [vmem:[#allocation8 + $0x6c] sm:$0xf]
    %v376 = vld [vmem:[#allocation8 + $0x70] sm:$0xf]
    %v377 = vld [vmem:[#allocation8 + $0x74] sm:$0xf]
    %v378 = vld [vmem:[#allocation8 + $0x78] sm:$0xf]
    %v379 = vld [vmem:[#allocation8 + $0x7c] sm:$0xf]
    %v380 = vld [vmem:[%s6] sm:$0x1]
    %v382 = vlaneseq
    %v383 = vshrl.u32 %v382, 7
    %v384 = vsub.s32 0, %v383
    %v385 = vrot.slane %v380, %v384
    %v419 = vunpack.c.l.b16 %v348
    %v420 = vunpack.c.l.b16 %v349
    %v421 = vunpack.c.l.b16 %v350
    %v422 = vunpack.c.l.b16 %v351
    %v423 = vunpack.c.l.b16 %v352
    %v424 = vunpack.c.l.b16 %v353
    %v425 = vunpack.c.l.b16 %v354
    %v426 = vunpack.c.l.b16 %v355
    %v427 = vunpack.c.l.b16 %v356
    %v428 = vunpack.c.l.b16 %v357
    %v429 = vunpack.c.l.b16 %v358
    %v430 = vunpack.c.l.b16 %v359
    %v431 = vunpack.c.l.b16 %v360
    %v432 = vunpack.c.l.b16 %v361
    %v433 = vunpack.c.l.b16 %v362
    %v434 = vunpack.c.l.b16 %v363
    %v435 = vunpack.c.l.b16 %v364
    %v436 = vunpack.c.l.b16 %v365
    %v437 = vunpack.c.l.b16 %v366
    %v438 = vunpack.c.l.b16 %v367
    %v439 = vunpack.c.l.b16 %v368
    %v440 = vunpack.c.l.b16 %v369
    %v441 = vunpack.c.l.b16 %v370
    %v442 = vunpack.c.l.b16 %v371
    %v443 = vunpack.c.l.b16 %v372
    %v444 = vunpack.c.l.b16 %v373
    %v445 = vunpack.c.l.b16 %v374
    %v446 = vunpack.c.l.b16 %v375
    %v447 = vunpack.c.l.b16 %v376
    %v448 = vunpack.c.l.b16 %v377
    %v449 = vunpack.c.l.b16 %v378
    %v450 = vunpack.c.l.b16 %v379
    %v451 = vpack.c.b16 %v420, %v419
    %v452 = vpack.c.b16 %v422, %v421
    %v453 = vpack.c.b16 %v424, %v423
    %v454 = vpack.c.b16 %v426, %v425
    %v455 = vpack.c.b16 %v428, %v427
    %v456 = vpack.c.b16 %v430, %v429
    %v457 = vpack.c.b16 %v432, %v431
    %v458 = vpack.c.b16 %v434, %v433
    %v459 = vpack.c.b16 %v436, %v435
    %v460 = vpack.c.b16 %v438, %v437
    %v461 = vpack.c.b16 %v440, %v439
    %v462 = vpack.c.b16 %v442, %v441
    %v463 = vpack.c.b16 %v444, %v443
    %v464 = vpack.c.b16 %v446, %v445
    %v465 = vpack.c.b16 %v448, %v447
    %v466 = vpack.c.b16 %v450, %v449
    %483 = vmatprep.subr.bf16.mxu0 0
    %484 = vmatpush1.bf16.msra.mxu0 %v458
    %485 = vmatprep.subr.bf16.mxu0 0
    %486 = vmatpush1.bf16.msra.mxu0 %v457
    %487 = vmatprep.subr.bf16.mxu0 0
    %488 = vmatpush1.bf16.msra.mxu0 %v456
    %489 = vmatprep.subr.bf16.mxu0 0
    %490 = vmatpush1.bf16.msra.mxu0 %v455
    %491 = vmatprep.subr.bf16.mxu0 0
    %492 = vmatpush1.bf16.msra.mxu0 %v454
    %493 = vmatprep.subr.bf16.mxu0 0
    %494 = vmatpush1.bf16.msra.mxu0 %v453
    %495 = vmatprep.subr.bf16.mxu0 0
    %496 = vmatpush1.bf16.msra.mxu0 %v452
    %497 = vmatprep.subr.bf16.mxu0 0
    %498 = vmatpush1.bf16.msra.mxu0 %v451
    %499 = vmatprep.subr.bf16.mxu0 0
    %500 = vmatpush2.bf16.msra.mxu0 %v466
    %501 = vmatprep.subr.bf16.mxu0 0
    %502 = vmatpush2.bf16.msra.mxu0 %v465
    %503 = vmatprep.subr.bf16.mxu0 0
    %504 = vmatpush2.bf16.msra.mxu0 %v464
    %505 = vmatprep.subr.bf16.mxu0 0
    %506 = vmatpush2.bf16.msra.mxu0 %v463
    %507 = vmatprep.subr.bf16.mxu0 0
    %508 = vmatpush2.bf16.msra.mxu0 %v462
    %509 = vmatprep.subr.bf16.mxu0 0
    %510 = vmatpush2.bf16.msra.mxu0 %v461
    %511 = vmatprep.subr.bf16.mxu0 0
    %512 = vmatpush2.bf16.msra.mxu0 %v460
    %513 = vmatprep.subr.bf16.mxu0 0
    %514 = vmatpush2.bf16.msra.mxu0 %v459
    %515 = vmatprep.mubr.bf16.mxu0 %v347
    %516 = vmatmul.mubr.bf16.gmra.mxu0 %v346
    %v517 = vpop.f32.mrf.mxu0
    %v518 = vadd.f32 %v385, %v517
    %v519 = vpop.f32.mrf.mxu0
    %v520 = vpop.f32.mrf.mxu0
    %v521 = vpop.f32.mrf.mxu0
    %522 = vdwg.mxu0
    %523 = vst [vmem:[#allocation10] sm:$0xff] %v518
    // Predicated region
    $region46: #{tpu_custom_call.1} parent=1 // pred_check
      _
    $region47: #{tpu_custom_call.1} parent=1 // pred_check_branch
      %525 = sbr.rel (0) target = $region49
    $region48: #{tpu_custom_call.1} parent=1 // pred_region
      %s527 = ssub.s32 128, 128
      %528 = vsyncadd [#allocation4], %s527
      %s530 = sshll.u32 [#allocation10], 4
      %s531 = int_to_ptr.vmem [resolvable:$true] %s530
      %533 = dma.vmem_to_hbm [thread:$0]  %s531, 128, %s7, [#allocation4]
    $region49: #{tpu_custom_call.1} parent=1 // pred_fallthru
      _
    // Predicated region
    $region50: #{tpu_custom_call.1} parent=1 // pred_check
      _
    $region51: #{tpu_custom_call.1} parent=1 // pred_check_branch
      %535 = sbr.rel (0) target = $region53
    $region52: #{tpu_custom_call.1} parent=1 // pred_region
      %536 = dma.done [#allocation4], 128
    $region53: #{tpu_custom_call.1} parent=1 // pred_fallthru
      _
    %537 = vsyncpa [#allocation3], 1
    %538 = vsyncpa [#allocation6], 1
    %539 = vsyncpa [#allocation9], 1
    %540 = vsyncpa [#allocation4], 1

</llo_original>
